<compile_context>
chip_gen: v5e
topology: v5e:2x2
jax: 0.10.0
libtpu: 0.0.40
codegen_flags: <defaults>
</compile_context>

<pallas_src>
import jax
import jax.numpy as jnp
from jax.experimental import pallas as pl
from jax.experimental.pallas import tpu as pltpu

HID = 128  # fc2 output features, nn.Linear(input_dim, 128)


def _feature_net_kernel(x_ref, wqkv_ref, bqkv_ref, gsum_ref, wfc2_ref, bfc2_ref,
                        y_ref, attn_ref):
    """One batch tile: x (TB, D) -> y (TB, 128) f32, attn (TB, D*D) bf16."""
    dd = attn_ref.shape[-1]                                        # D*D (static)
    bf16 = jnp.bfloat16

    # Fused q/k/v projection, pre-expanded to the (TB, D*D) layout.
    # bf16 operands, f32 accumulation; f32 bias added to the f32 accumulator.
    qkv = jnp.dot(x_ref[...].astype(bf16), wqkv_ref[...],
                  preferred_element_type=jnp.float32) + bqkv_ref[...]   # (TB, 3*DD) f32
    q_e = qkv[:, 0:dd]                # q[b,i] repeated over its key group
    k_t = qkv[:, dd:2 * dd]           # k[b,j] tiled over query groups
    v_t = qkv[:, 2 * dd:3 * dd]       # v[b,j] tiled over query groups

    # Exact per-(b,i) max of q[b,i]*k[b,:] (no grouped reduce needed).
    k_max = jnp.max(k_t, axis=-1, keepdims=True)                   # = max_j k[b,j]
    k_min = jnp.min(k_t, axis=-1, keepdims=True)
    m_e = jnp.where(q_e >= 0.0, q_e * k_max, q_e * k_min)

    e = jnp.exp(q_e * k_t - m_e)                                   # (TB, DD) f32
    # Per-group softmax sums, broadcast back to (TB, DD) via the 0/1 block-diag
    # matmul.  gsum is exact in bf16.
    # TODO(synk): if a bundle dump shows the EUP saturating after the bf16
    # matmul change, collect compact (TB, D) group sums, take one reciprocal
    # there and broadcast back with a second 0/1 matmul (trades EUP pushes for
    # a cheap extra MXU pass).
    s_e = jnp.dot(e.astype(bf16), gsum_ref[...],
                  preferred_element_type=jnp.float32)
    attn = e * pl.reciprocal(s_e, approx=True)
    attn_ref[...] = attn.astype(attn_ref.dtype)        # bf16 store: dominant HBM stream

    # context @ (folded out_proj + fc2): wfc2_ref is the row-replicated fc2 weight.
    h = jnp.dot((attn * v_t).astype(bf16), wfc2_ref[...],
                preferred_element_type=jnp.float32) + bfc2_ref[...]
    # TODO(synk): training-mode dropout (p=0.5) via pltpu.prng_seed/prng_random_bits.
    y_ref[...] = jnp.maximum(h, 0.0)


def pack_params(p, D, hid=HID):
    """Host-side constant folding + lane-dense weight expansion (done once).

    NOTE scaling cliff: wqkv is (D, 3*D^2), gsum is D^2 x D^2 (scales D^4),
    wfc2_big is D^2 x HID.  Fine at D=16 (gsum = 128 KiB bf16); at D>=32 switch
    to a compact (D, 3D) projection + in-kernel repeat/tile and a two-stage
    collect/broadcast for the group sums.
    """
    f32, bf16 = jnp.float32, jnp.bfloat16
    # Fold MHA in-proj scalars into the q/k/v Linear weights.
    wq = p["wq_t"] * p["wq_in"]; bq = p["bq"] * p["wq_in"] + p["bq_in"]
    wk = p["wk_t"] * p["wk_in"]; bk = p["bk"] * p["wk_in"] + p["bk_in"]
    wv = p["wv_t"] * p["wv_in"]; bv = p["bv"] * p["wv_in"] + p["bv_in"]
    # Fold MHA out-proj scalar affine into fc2.
    wfc2 = p["wfc2_t"] * p["w_out"]
    bfc2 = p["bfc2"] + p["b_out"] * jnp.sum(p["wfc2_t"], axis=0, keepdims=True)

    # Exact 0/1 restructuring (repeat/tile), no matmuls -> no rounding.
    wq_e = jnp.repeat(wq, D, axis=1)          # col i*D+j <- wq[:, i]
    bq_e = jnp.repeat(bq, D, axis=1)
    wk_tile = jnp.tile(wk, (1, D))            # col i*D+j <- wk[:, j]
    bk_tile = jnp.tile(bk, (1, D))
    wv_tile = jnp.tile(wv, (1, D))
    bv_tile = jnp.tile(bv, (1, D))
    # Matmul weights in bf16 (MXU operands); biases stay f32 (added post-accum).
    wqkv = jnp.concatenate([wq_e, wk_tile, wv_tile], axis=1).astype(bf16)  # (D, 3*DD)
    bqkv = jnp.concatenate([bq_e, bk_tile, bv_tile], axis=1).astype(f32)   # (1, 3*DD)

    gsum = jnp.kron(jnp.eye(D, dtype=f32),
                    jnp.ones((D, D), f32)).astype(bf16)                    # (DD, DD)
    wfc2_big = jnp.repeat(wfc2, D, axis=0).astype(bf16)                    # (DD, hid)
    return dict(wqkv=wqkv, bqkv=bqkv, gsum=gsum, wfc2=wfc2_big,
                bfc2=bfc2.astype(f32))


def feature_net_with_attention(x, packed, *, tb=256, attn_dtype=jnp.bfloat16):
    """y: (B, 128) f32 ; attn: (B, D, D) attn_dtype (bf16 halves the HBM write).

    Pick tb so that cdiv(B, tb) >= 2 (ideally >= 8): keeps both v7x TensorCores
    fed and the attn/y writeback overlapped under compute on all generations.
    """
    B, D = x.shape
    dd = D * D
    tb = min(tb, B)
    grid = (pl.cdiv(B, tb),)

    wqkv, bqkv, gsum = packed["wqkv"], packed["bqkv"], packed["gsum"]
    wfc2, bfc2 = packed["wfc2"], packed["bfc2"]
    hid = wfc2.shape[1]

    def full(arr):  # whole-array block, constant index -> fetched once, resident
        return pl.BlockSpec(arr.shape, lambda i: (0, 0))

    # v5e's scoped-VMEM default is only 16 MiB; raise it for large batch tiles.
    vmem_limit = 64 * 1024 * 1024 if tb > 256 else None

    y, attn_flat = pl.pallas_call(
        _feature_net_kernel,
        out_shape=(jax.ShapeDtypeStruct((B, hid), jnp.float32),
                   jax.ShapeDtypeStruct((B, dd), attn_dtype)),
        grid=grid,
        in_specs=[pl.BlockSpec((tb, D), lambda i: (i, 0)),
                  full(wqkv), full(bqkv), full(gsum), full(wfc2), full(bfc2)],
        out_specs=(pl.BlockSpec((tb, hid), lambda i: (i, 0)),
                   pl.BlockSpec((tb, dd), lambda i: (i, 0))),
        compiler_params=pltpu.CompilerParams(
            dimension_semantics=("parallel",),      # no-op on v5e/v6e (1 TC); splits batch on v7x
            vmem_limit_bytes=vmem_limit),
    )(x, wqkv, bqkv, gsum, wfc2, bfc2)

    return y, attn_flat.reshape(B, D, D)


def _init_params(key, D, hid=HID):
    """PyTorch-Linear-style deterministic init (raw, unfolded parameters)."""
    ks = jax.random.split(key, 12)

    def lin(kw, kb, fan_in, fan_out):
        bound = 1.0 / jnp.sqrt(fan_in)
        w = jax.random.uniform(kw, (fan_in, fan_out), jnp.float32, -bound, bound)
        b = jax.random.uniform(kb, (1, fan_out), jnp.float32, -bound, bound)
        return w, b

    wq_t, bq = lin(ks[0], ks[1], D, D)
    wk_t, bk = lin(ks[2], ks[3], D, D)
    wv_t, bv = lin(ks[4], ks[5], D, D)
    wfc2_t, bfc2 = lin(ks[6], ks[7], D, hid)
    # nn.MultiheadAttention(1, 1): in_proj_weight (3,1), in_proj_bias (3,), out_proj Linear(1,1)
    inw = jax.random.uniform(ks[8], (3,), jnp.float32, -1.0, 1.0)
    inb = jax.random.uniform(ks[9], (3,), jnp.float32, -1.0, 1.0)
    outw = jax.random.uniform(ks[10], (), jnp.float32, -1.0, 1.0)
    outb = jax.random.uniform(ks[11], (), jnp.float32, -1.0, 1.0)
    return dict(wq_t=wq_t, bq=bq, wk_t=wk_t, bk=bk, wv_t=wv_t, bv=bv,
                wfc2_t=wfc2_t, bfc2=bfc2,
                wq_in=inw[0], wk_in=inw[1], wv_in=inw[2],
                bq_in=inb[0], bk_in=inb[1], bv_in=inb[2],
                w_out=outw, b_out=outb)


def _reference(x, p):
    """Pure-JAX reference of the PyTorch forward (eval mode), f32 matmuls."""
    with jax.default_matmul_precision("float32"):
        Q = x @ p["wq_t"] + p["bq"]
        K = x @ p["wk_t"] + p["bk"]
        V = x @ p["wv_t"] + p["bv"]
        q = Q * p["wq_in"] + p["bq_in"]
        k = K * p["wk_in"] + p["bk_in"]
        v = V * p["wv_in"] + p["bv_in"]
        scores = q[:, :, None] * k[:, None, :]      # head_dim=1 -> scale = 1
        attn = jax.nn.softmax(scores, axis=-1)
        ctx = jnp.sum(attn * v[:, None, :], axis=-1)
        out = ctx * p["w_out"] + p["b_out"]
        y = jnp.maximum(out @ p["wfc2_t"] + p["bfc2"], 0.0)
    return y, attn


if __name__ == "__main__":
    # input_dim = 16; B=512 with tb=64 exercises an 8-step parallel batch grid.
    B, D = 512, 16
    key = jax.random.PRNGKey(0)
    kx, kp = jax.random.split(key)
    x = jax.random.normal(kx, (B, D), jnp.float32)

    raw = _init_params(kp, D)
    packed = pack_params(raw, D)

    y, attn = feature_net_with_attention(x, packed, tb=64)
    jax.block_until_ready((y, attn))

    y_ref, attn_ref = _reference(x, raw)
    assert y.shape == (B, HID) and attn.shape == (B, D, D)
    attn_f32 = attn.astype(jnp.float32)
    # Tolerances account for bf16 matmul operands, bf16 attn store and
    # pl.reciprocal(approx=True); rows of attn sum to 1 only to ~1e-3.
    assert jnp.allclose(attn_f32, attn_ref, atol=1.5e-2, rtol=2e-2), \
        float(jnp.max(jnp.abs(attn_f32 - attn_ref)))
    assert jnp.allclose(y, y_ref, atol=3e-2, rtol=3e-2), \
        float(jnp.max(jnp.abs(y - y_ref)))

    print("KERNEL_OK")
</pallas_src>

<mosaic_0001>
module attributes {stable_mosaic.version = 11 : i64} {
  func.func @_feature_net_kernel(%arg0: i32, %arg1: memref<64x16xf32, #tpu.memory_space<vmem>>, %arg2: memref<16x768xbf16, #tpu.memory_space<vmem>>, %arg3: memref<1x768xf32, #tpu.memory_space<vmem>>, %arg4: memref<256x256xbf16, #tpu.memory_space<vmem>>, %arg5: memref<256x128xbf16, #tpu.memory_space<vmem>>, %arg6: memref<1x128xf32, #tpu.memory_space<vmem>>, %arg7: memref<64x128xf32, #tpu.memory_space<vmem>>, %arg8: memref<64x256xbf16, #tpu.memory_space<vmem>>) attributes {dimension_semantics = [#tpu.dimension_semantics<parallel>], iteration_bounds = array<i64: 8>, scalar_prefetch = 0 : i64, scratch_operands = 0 : i64, tpu.core_type = #tpu.core_type<tc>, window_params = [{transform_indices = @transform_0, window_bounds = array<i64: 64, 16>}, {pipeline_mode = #tpu.pipeline_mode<synchronous>, transform_indices = @transform_1, window_bounds = array<i64: 16, 768>}, {pipeline_mode = #tpu.pipeline_mode<synchronous>, transform_indices = @transform_2, window_bounds = array<i64: 1, 768>}, {pipeline_mode = #tpu.pipeline_mode<synchronous>, transform_indices = @transform_3, window_bounds = array<i64: 256, 256>}, {pipeline_mode = #tpu.pipeline_mode<synchronous>, transform_indices = @transform_4, window_bounds = array<i64: 256, 128>}, {pipeline_mode = #tpu.pipeline_mode<synchronous>, transform_indices = @transform_5, window_bounds = array<i64: 1, 128>}, {transform_indices = @transform_6, window_bounds = array<i64: 64, 128>}, {transform_indices = @transform_7, window_bounds = array<i64: 64, 256>}]} {
    %c0 = arith.constant 0 : index
    %c0_0 = arith.constant 0 : index
    %0 = vector.load %arg1[%c0, %c0_0] : memref<64x16xf32, #tpu.memory_space<vmem>>, vector<64x16xf32>
    %1 = arith.truncf %0 : vector<64x16xf32> to vector<64x16xbf16>
    %c0_1 = arith.constant 0 : index
    %c0_2 = arith.constant 0 : index
    %2 = vector.load %arg2[%c0_1, %c0_2] : memref<16x768xbf16, #tpu.memory_space<vmem>>, vector<16x768xbf16>
    %cst = arith.constant dense<0.000000e+00> : vector<64x768xf32>
    %3 = tpu.matmul %1, %2, %cst {dimension_numbers = #tpu.dot_dimension_numbers<[1], [0], [0], [1], [0, 0, 1, 1], [], []>} : vector<64x16xbf16>, vector<16x768xbf16>, vector<64x768xf32> -> vector<64x768xf32>
    %c0_3 = arith.constant 0 : index
    %c0_4 = arith.constant 0 : index
    %4 = vector.load %arg3[%c0_3, %c0_4] : memref<1x768xf32, #tpu.memory_space<vmem>>, vector<1x768xf32>
    %5 = vector.broadcast %4 : vector<1x768xf32> to vector<64x768xf32>
    %6 = arith.addf %3, %5 : vector<64x768xf32>
    %7 = vector.extract_strided_slice %6 {offsets = [0, 0], sizes = [64, 256], strides = [1, 1]} : vector<64x768xf32> to vector<64x256xf32>
    %8 = vector.extract_strided_slice %6 {offsets = [0, 256], sizes = [64, 256], strides = [1, 1]} : vector<64x768xf32> to vector<64x256xf32>
    %9 = vector.extract_strided_slice %6 {offsets = [0, 512], sizes = [64, 256], strides = [1, 1]} : vector<64x768xf32> to vector<64x256xf32>
    %cst_5 = arith.constant dense<0xFF800000> : vector<64xf32>
    %10 = vector.multi_reduction <maximumf>, %8, %cst_5 [1] : vector<64x256xf32> to vector<64xf32>
    %11 = vector.shape_cast %10 : vector<64xf32> to vector<64x1xf32>
    %cst_6 = arith.constant dense<0x7F800000> : vector<64xf32>
    %12 = vector.multi_reduction <minimumf>, %8, %cst_6 [1] : vector<64x256xf32> to vector<64xf32>
    %13 = vector.shape_cast %12 : vector<64xf32> to vector<64x1xf32>
    %cst_7 = arith.constant 0.000000e+00 : f32
    %14 = vector.broadcast %cst_7 : f32 to vector<64x256xf32>
    %15 = arith.cmpf oge, %7, %14 : vector<64x256xf32>
    %16 = vector.broadcast %11 : vector<64x1xf32> to vector<64x256xf32>
    %17 = arith.mulf %7, %16 : vector<64x256xf32>
    %18 = vector.broadcast %13 : vector<64x1xf32> to vector<64x256xf32>
    %19 = arith.mulf %7, %18 : vector<64x256xf32>
    %20 = arith.select %15, %17, %19 : vector<64x256xi1>, vector<64x256xf32>
    %21 = arith.mulf %7, %8 : vector<64x256xf32>
    %22 = arith.subf %21, %20 : vector<64x256xf32>
    %23 = math.exp %22 : vector<64x256xf32>
    %24 = arith.truncf %23 : vector<64x256xf32> to vector<64x256xbf16>
    %c0_8 = arith.constant 0 : index
    %c0_9 = arith.constant 0 : index
    %25 = vector.load %arg4[%c0_8, %c0_9] : memref<256x256xbf16, #tpu.memory_space<vmem>>, vector<256x256xbf16>
    %cst_10 = arith.constant dense<0.000000e+00> : vector<64x256xf32>
    %26 = tpu.matmul %24, %25, %cst_10 {dimension_numbers = #tpu.dot_dimension_numbers<[1], [0], [0], [1], [0, 0, 1, 1], [], []>} : vector<64x256xbf16>, vector<256x256xbf16>, vector<64x256xf32> -> vector<64x256xf32>
    %27 = tpu.reciprocal %26 {approx = true} : vector<64x256xf32> -> vector<64x256xf32>
    %28 = arith.mulf %23, %27 : vector<64x256xf32>
    %29 = arith.truncf %28 : vector<64x256xf32> to vector<64x256xbf16>
    %c0_11 = arith.constant 0 : index
    %c0_12 = arith.constant 0 : index
    %30 = vector.load %arg8[%c0_11, %c0_12] : memref<64x256xbf16, #tpu.memory_space<vmem>>, vector<64x256xbf16>
    tpu.vector_store %arg8[%c0_11, %c0_12], %29 {strides = array<i32>} : memref<64x256xbf16, #tpu.memory_space<vmem>>, vector<64x256xbf16>,
    %31 = arith.mulf %28, %9 : vector<64x256xf32>
    %32 = arith.truncf %31 : vector<64x256xf32> to vector<64x256xbf16>
    %c0_13 = arith.constant 0 : index
    %c0_14 = arith.constant 0 : index
    %33 = vector.load %arg5[%c0_13, %c0_14] : memref<256x128xbf16, #tpu.memory_space<vmem>>, vector<256x128xbf16>
    %cst_15 = arith.constant dense<0.000000e+00> : vector<64x128xf32>
    %34 = tpu.matmul %32, %33, %cst_15 {dimension_numbers = #tpu.dot_dimension_numbers<[1], [0], [0], [1], [0, 0, 1, 1], [], []>} : vector<64x256xbf16>, vector<256x128xbf16>, vector<64x128xf32> -> vector<64x128xf32>
    %c0_16 = arith.constant 0 : index
    %c0_17 = arith.constant 0 : index
    %35 = vector.load %arg6[%c0_16, %c0_17] : memref<1x128xf32, #tpu.memory_space<vmem>>, vector<1x128xf32>
    %36 = vector.broadcast %35 : vector<1x128xf32> to vector<64x128xf32>
    %37 = arith.addf %34, %36 : vector<64x128xf32>
    %cst_18 = arith.constant 0.000000e+00 : f32
    %38 = vector.broadcast %cst_18 : f32 to vector<64x128xf32>
    %39 = arith.maximumf %37, %38 : vector<64x128xf32>
    %c0_19 = arith.constant 0 : index
    %c0_20 = arith.constant 0 : index
    %40 = vector.load %arg7[%c0_19, %c0_20] : memref<64x128xf32, #tpu.memory_space<vmem>>, vector<64x128xf32>
    tpu.vector_store %arg7[%c0_19, %c0_20], %39 {strides = array<i32>} : memref<64x128xf32, #tpu.memory_space<vmem>>, vector<64x128xf32>,
    return
  }
  func.func @transform_0(%arg0: i32) -> (i32, i32) {
    %c0_i32 = arith.constant 0 : i32
    %c0_i32_0 = arith.constant 0 : i32
    return %arg0, %c0_i32 : i32, i32
  }
  func.func @transform_1(%arg0: i32) -> (i32, i32) {
    %c0_i32 = arith.constant 0 : i32
    %c0_i32_0 = arith.constant 0 : i32
    %c0_i32_1 = arith.constant 0 : i32
    return %c0_i32, %c0_i32_0 : i32, i32
  }
  func.func @transform_2(%arg0: i32) -> (i32, i32) {
    %c0_i32 = arith.constant 0 : i32
    %c0_i32_0 = arith.constant 0 : i32
    %c0_i32_1 = arith.constant 0 : i32
    return %c0_i32, %c0_i32_0 : i32, i32
  }
  func.func @transform_3(%arg0: i32) -> (i32, i32) {
    %c0_i32 = arith.constant 0 : i32
    %c0_i32_0 = arith.constant 0 : i32
    %c0_i32_1 = arith.constant 0 : i32
    return %c0_i32, %c0_i32_0 : i32, i32
  }
  func.func @transform_4(%arg0: i32) -> (i32, i32) {
    %c0_i32 = arith.constant 0 : i32
    %c0_i32_0 = arith.constant 0 : i32
    %c0_i32_1 = arith.constant 0 : i32
    return %c0_i32, %c0_i32_0 : i32, i32
  }
  func.func @transform_5(%arg0: i32) -> (i32, i32) {
    %c0_i32 = arith.constant 0 : i32
    %c0_i32_0 = arith.constant 0 : i32
    %c0_i32_1 = arith.constant 0 : i32
    return %c0_i32, %c0_i32_0 : i32, i32
  }
  func.func @transform_6(%arg0: i32) -> (i32, i32) {
    %c0_i32 = arith.constant 0 : i32
    %c0_i32_0 = arith.constant 0 : i32
    return %arg0, %c0_i32 : i32, i32
  }
  func.func @transform_7(%arg0: i32) -> (i32, i32) {
    %c0_i32 = arith.constant 0 : i32
    %c0_i32_0 = arith.constant 0 : i32
    return %arg0, %c0_i32 : i32, i32
  }
}

</mosaic_0001>

<llo_original>
// kernel: tpu_custom_call.1
$region0: #{tpu_custom_call.1}
  #allocation0 [shape = 'u32[]', space=smem, size = 0x4, offset = 0x4, fixed_abs, tag = 'smem constant byte address 0x4 - core index']
  #allocation1 [shape = 'u32[72,128]{1,0:T(1,128)}', space=vmem, size = 0x9000, scoped, tag = 'internal scratch']
  %s0 = inlined_call_operand.vmem [shape: f32[512,16], index: 0, kind: input, shape index: {}]
  %s1 = inlined_call_operand.vmem [shape: bf16[16,768], index: 1, kind: input, shape index: {}]
  %s2 = inlined_call_operand.vmem [shape: f32[1,768], index: 2, kind: input, shape index: {}]
  %s3 = inlined_call_operand.vmem [shape: bf16[256,256], index: 3, kind: input, shape index: {}]
  %s4 = inlined_call_operand.vmem [shape: bf16[256,128], index: 4, kind: input, shape index: {}]
  %s5 = inlined_call_operand.vmem [shape: f32[1,128], index: 5, kind: input, shape index: {}]
  %s6 = inlined_call_operand.hbm [shape: f32[512,128], index: 6, kind: output, shape index: {0}]
  %s7 = inlined_call_operand.hbm [shape: bf16[512,256], index: 7, kind: output, shape index: {1}]
  %8 = xla_tuple %s6, %s7
  %s9 = sld [smem:[#allocation0]]
  $region65: #{tpu_custom_call.1} parent=0
    _
  %s11 = ssub.s32 1, %s9
  %s12 = scalar_select 0, %s11, %s9
  $region1: #{tpu_custom_call.1} parent=0
    #allocation2 [shape = 'u8[65536]{0}', space=vmem, size = 0x10000, scoped, tag = 'output window, operand 0']
    #allocation3 [shape = 's32[2]{0}', space=sflag, size = 0x8, scoped, tag = 'scoped memory for tpu_custom_call.1']
    #allocation4 [shape = 'u8[65536]{0}', space=vmem, size = 0x10000, scoped, tag = 'output window, operand 1']
    #allocation5 [shape = 's32[2]{0}', space=sflag, size = 0x8, scoped, tag = 'scoped memory for tpu_custom_call.1']
    %13 = vsyncpa [#allocation3], 0
    %s14 = scalar_lea.sflag [#allocation3], 1
    %15 = vsyncpa %s14, 0
    %16 = vsyncpa [#allocation5], 0
    %s17 = scalar_lea.sflag [#allocation5], 1
    %18 = vsyncpa %s17, 0
    loop: start=0, step=1, limit=10
    $region2: #{tpu_custom_call.1} parent=1 // loop_pre_header
      _
    $region3: #{tpu_custom_call.1} parent=1 // loop_header
      %s20 = sphi 0, %s24
      %p21 = scmp.ge.s32.totalorder %s20, 10
      %s30 = sphi 0, %s32
      %s33 = sphi 0, %s30
      %s34 = sphi 0, %s33
      %s50 = sphi 0, %s34
      %s54 = sphi 0, %s54
      %s56 = sphi 0, %s54
      %s57 = sphi 0, %s56
      %s71 = sphi 0, %s57
      %s75 = sphi 0, %s75
      %s77 = sphi 0, %s75
      %s78 = sphi 0, %s77
      %s92 = sphi 0, %s78
      %s96 = sphi 0, %s96
      %s98 = sphi 0, %s96
      %s99 = sphi 0, %s98
      %s113 = sphi 0, %s99
      %s117 = sphi 0, %s117
      %s119 = sphi 0, %s117
      %s120 = sphi 0, %s119
      %s134 = sphi 0, %s120
      %s138 = sphi 0, %s138
      %s140 = sphi 0, %s138
      %s141 = sphi 0, %s140
      %s155 = sphi 0, %s141
      %s161 = sphi 0, %s163
      %s164 = sphi 0, %s161
      %s165 = sphi 0, %s164
      %s181 = sphi 0, %s165
      %s187 = sphi 0, %s189
      %s190 = sphi 0, %s187
      %s191 = sphi 0, %s190
      %s207 = sphi 0, %s191
    $region4: #{tpu_custom_call.1} parent=1 // loop_header_branch
      %23 = sbr.rel (%p21) target = $region8
    $region5: #{tpu_custom_call.1} parent=1 // loop_body
      %s25 = ssub.s32 %s20, 1
      %s26 = ssub.s32 %s20, 2
      %s27 = sadd.s32 %s20, 1
      %s28 = ssub.s32 %s20, %s27
      %p29 = scmp.eq.s32.totalorder %s28, 0
      %s31 = sadd.s32 %s30, 1
      %s32 = scalar_select %p29, %s30, %s31
      %p35 = pneg %p29
      %p36 = scmp.eq.s32.totalorder %s20, 7
      %p37 = por %p35, %p36
      %p38 = scmp.ne.s32.totalorder %s30, %s33
      %p39 = scmp.eq.s32.totalorder %s20, 0
      %p40 = por %p38, %p39
      %p41 = scmp.ne.s32.totalorder %s30, %s33
      %p42 = scmp.eq.s32.totalorder %s25, 7
      %p43 = por %p41, %p42
      %p44 = scmp.ne.s32.totalorder %s33, %s34
      %p45 = scmp.eq.s32.totalorder %s25, 0
      %p46 = por %p44, %p45
      %p47 = scmp.ne.s32.totalorder %s33, %s34
      %p48 = scmp.eq.s32.totalorder %s26, 7
      %p49 = por %p47, %p48
      %p51 = scmp.ne.s32.totalorder %s34, %s50
      %p52 = scmp.eq.s32.totalorder %s26, 0
      %p53 = por %p51, %p52
      %s55 = sadd.s32 %s54, 1
      %p58 = scmp.eq.s32.totalorder %s20, 7
      %p59 = scmp.ne.s32.totalorder %s54, %s56
      %p60 = scmp.eq.s32.totalorder %s20, 0
      %p61 = por %p59, %p60
      %p62 = scmp.ne.s32.totalorder %s54, %s56
      %p63 = scmp.eq.s32.totalorder %s25, 7
      %p64 = por %p62, %p63
      %p65 = scmp.ne.s32.totalorder %s56, %s57
      %p66 = scmp.eq.s32.totalorder %s25, 0
      %p67 = por %p65, %p66
      %p68 = scmp.ne.s32.totalorder %s56, %s57
      %p69 = scmp.eq.s32.totalorder %s26, 7
      %p70 = por %p68, %p69
      %p72 = scmp.ne.s32.totalorder %s57, %s71
      %p73 = scmp.eq.s32.totalorder %s26, 0
      %p74 = por %p72, %p73
      %s76 = sadd.s32 %s75, 1
      %p79 = scmp.eq.s32.totalorder %s20, 7
      %p80 = scmp.ne.s32.totalorder %s75, %s77
      %p81 = scmp.eq.s32.totalorder %s20, 0
      %p82 = por %p80, %p81
      %p83 = scmp.ne.s32.totalorder %s75, %s77
      %p84 = scmp.eq.s32.totalorder %s25, 7
      %p85 = por %p83, %p84
      %p86 = scmp.ne.s32.totalorder %s77, %s78
      %p87 = scmp.eq.s32.totalorder %s25, 0
      %p88 = por %p86, %p87
      %p89 = scmp.ne.s32.totalorder %s77, %s78
      %p90 = scmp.eq.s32.totalorder %s26, 7
      %p91 = por %p89, %p90
      %p93 = scmp.ne.s32.totalorder %s78, %s92
      %p94 = scmp.eq.s32.totalorder %s26, 0
      %p95 = por %p93, %p94
      %s97 = sadd.s32 %s96, 1
      %p100 = scmp.eq.s32.totalorder %s20, 7
      %p101 = scmp.ne.s32.totalorder %s96, %s98
      %p102 = scmp.eq.s32.totalorder %s20, 0
      %p103 = por %p101, %p102
      %p104 = scmp.ne.s32.totalorder %s96, %s98
      %p105 = scmp.eq.s32.totalorder %s25, 7
      %p106 = por %p104, %p105
      %p107 = scmp.ne.s32.totalorder %s98, %s99
      %p108 = scmp.eq.s32.totalorder %s25, 0
      %p109 = por %p107, %p108
      %p110 = scmp.ne.s32.totalorder %s98, %s99
      %p111 = scmp.eq.s32.totalorder %s26, 7
      %p112 = por %p110, %p111
      %p114 = scmp.ne.s32.totalorder %s99, %s113
      %p115 = scmp.eq.s32.totalorder %s26, 0
      %p116 = por %p114, %p115
      %s118 = sadd.s32 %s117, 1
      %p121 = scmp.eq.s32.totalorder %s20, 7
      %p122 = scmp.ne.s32.totalorder %s117, %s119
      %p123 = scmp.eq.s32.totalorder %s20, 0
      %p124 = por %p122, %p123
      %p125 = scmp.ne.s32.totalorder %s117, %s119
      %p126 = scmp.eq.s32.totalorder %s25, 7
      %p127 = por %p125, %p126
      %p128 = scmp.ne.s32.totalorder %s119, %s120
      %p129 = scmp.eq.s32.totalorder %s25, 0
      %p130 = por %p128, %p129
      %p131 = scmp.ne.s32.totalorder %s119, %s120
      %p132 = scmp.eq.s32.totalorder %s26, 7
      %p133 = por %p131, %p132
      %p135 = scmp.ne.s32.totalorder %s120, %s134
      %p136 = scmp.eq.s32.totalorder %s26, 0
      %p137 = por %p135, %p136
      %s139 = sadd.s32 %s138, 1
      %p142 = scmp.eq.s32.totalorder %s20, 7
      %p143 = scmp.ne.s32.totalorder %s138, %s140
      %p144 = scmp.eq.s32.totalorder %s20, 0
      %p145 = por %p143, %p144
      %p146 = scmp.ne.s32.totalorder %s138, %s140
      %p147 = scmp.eq.s32.totalorder %s25, 7
      %p148 = por %p146, %p147
      %p149 = scmp.ne.s32.totalorder %s140, %s141
      %p150 = scmp.eq.s32.totalorder %s25, 0
      %p151 = por %p149, %p150
      %p152 = scmp.ne.s32.totalorder %s140, %s141
      %p153 = scmp.eq.s32.totalorder %s26, 7
      %p154 = por %p152, %p153
      %p156 = scmp.ne.s32.totalorder %s141, %s155
      %p157 = scmp.eq.s32.totalorder %s26, 0
      %p158 = por %p156, %p157
      %s159 = ssub.s32 %s20, %s27
      %p160 = scmp.eq.s32.totalorder %s159, 0
      %s162 = sadd.s32 %s161, 1
      %s163 = scalar_select %p160, %s161, %s162
      %p166 = pneg %p160
      %p167 = scmp.eq.s32.totalorder %s20, 7
      %p168 = por %p166, %p167
      %p169 = scmp.ne.s32.totalorder %s161, %s164
      %p170 = scmp.eq.s32.totalorder %s20, 0
      %p171 = por %p169, %p170
      %p172 = scmp.ne.s32.totalorder %s161, %s164
      %p173 = scmp.eq.s32.totalorder %s25, 7
      %p174 = por %p172, %p173
      %p175 = scmp.ne.s32.totalorder %s164, %s165
      %p176 = scmp.eq.s32.totalorder %s25, 0
      %p177 = por %p175, %p176
      %p178 = scmp.ne.s32.totalorder %s164, %s165
      %p179 = scmp.eq.s32.totalorder %s26, 7
      %p180 = por %p178, %p179
      %p182 = scmp.ne.s32.totalorder %s165, %s181
      %p183 = scmp.eq.s32.totalorder %s26, 0
      %p184 = por %p182, %p183
      %s185 = ssub.s32 %s20, %s27
      %p186 = scmp.eq.s32.totalorder %s185, 0
      %s188 = sadd.s32 %s187, 1
      %s189 = scalar_select %p186, %s187, %s188
      %p192 = pneg %p186
      %p193 = scmp.eq.s32.totalorder %s20, 7
      %p194 = por %p192, %p193
      %p195 = scmp.ne.s32.totalorder %s187, %s190
      %p196 = scmp.eq.s32.totalorder %s20, 0
      %p197 = por %p195, %p196
      %p198 = scmp.ne.s32.totalorder %s187, %s190
      %p199 = scmp.eq.s32.totalorder %s25, 7
      %p200 = por %p198, %p199
      %p201 = scmp.ne.s32.totalorder %s190, %s191
      %p202 = scmp.eq.s32.totalorder %s25, 0
      %p203 = por %p201, %p202
      %p204 = scmp.ne.s32.totalorder %s190, %s191
      %p205 = scmp.eq.s32.totalorder %s26, 7
      %p206 = por %p204, %p205
      %p208 = scmp.ne.s32.totalorder %s191, %s207
      %p209 = scmp.eq.s32.totalorder %s26, 0
      %p210 = por %p208, %p209
      %p211 = scmp.le.s32.totalorder 1, %s20
      %p212 = scmp.lt.s32.totalorder %s20, 9
      %p213 = pnand %p211, %p212
      %p214 = pneg %p213
      // Predicated region
      $region9: #{tpu_custom_call.1} parent=5 // pred_check
        _
      $region10: #{tpu_custom_call.1} parent=5 // pred_check_branch
        %216 = sbr.rel (%p213) target = $region12
      $region11: #{tpu_custom_call.1} parent=5 // pred_region
        %s217 = ssub.s32 %s20, 1
        // Predicated region
        $region13: #{tpu_custom_call.1} parent=11 // pred_check
          %p218 = pneg %p67
        $region14: #{tpu_custom_call.1} parent=11 // pred_check_branch
          %220 = sbr.rel (%p218) target = $region16
        $region15: #{tpu_custom_call.1} parent=11 // pred_region
          _
        $region16: #{tpu_custom_call.1} parent=11 // pred_fallthru
          _
        // Predicated region
        $region17: #{tpu_custom_call.1} parent=11 // pred_check
          %p221 = pneg %p88
        $region18: #{tpu_custom_call.1} parent=11 // pred_check_branch
          %223 = sbr.rel (%p221) target = $region20
        $region19: #{tpu_custom_call.1} parent=11 // pred_region
          _
        $region20: #{tpu_custom_call.1} parent=11 // pred_fallthru
          _
        // Predicated region
        $region21: #{tpu_custom_call.1} parent=11 // pred_check
          %p224 = pneg %p109
        $region22: #{tpu_custom_call.1} parent=11 // pred_check_branch
          %226 = sbr.rel (%p224) target = $region24
        $region23: #{tpu_custom_call.1} parent=11 // pred_region
          _
        $region24: #{tpu_custom_call.1} parent=11 // pred_fallthru
          _
        // Predicated region
        $region25: #{tpu_custom_call.1} parent=11 // pred_check
          %p227 = pneg %p130
        $region26: #{tpu_custom_call.1} parent=11 // pred_check_branch
          %229 = sbr.rel (%p227) target = $region28
        $region27: #{tpu_custom_call.1} parent=11 // pred_region
          _
        $region28: #{tpu_custom_call.1} parent=11 // pred_fallthru
          _
        // Predicated region
        $region29: #{tpu_custom_call.1} parent=11 // pred_check
          %p230 = pneg %p151
        $region30: #{tpu_custom_call.1} parent=11 // pred_check_branch
          %232 = sbr.rel (%p230) target = $region32
        $region31: #{tpu_custom_call.1} parent=11 // pred_region
          _
        $region32: #{tpu_custom_call.1} parent=11 // pred_fallthru
          _
      $region12: #{tpu_custom_call.1} parent=5 // pred_fallthru
        _
      %p233 = scmp.lt.s32.totalorder %s20, 8
      // Predicated region
      $region33: #{tpu_custom_call.1} parent=5 // pred_check
        %p234 = pneg %p233
      $region34: #{tpu_custom_call.1} parent=5 // pred_check_branch
        %236 = sbr.rel (%p234) target = $region36
      $region35: #{tpu_custom_call.1} parent=5 // pred_region
        // Predicated region
        $region37: #{tpu_custom_call.1} parent=35 // pred_check
          %p237 = pneg %p40
        $region38: #{tpu_custom_call.1} parent=35 // pred_check_branch
          %239 = sbr.rel (%p237) target = $region40
        $region39: #{tpu_custom_call.1} parent=35 // pred_region
          %s240 = smul.u32 8, %s20
          %p241 = scmp.lt.s32.totalorder %s240, 63
          %s242 = scalar_select %p241, %s240, 63
          %s243 = smul.addr %s242, 8
          %s244 = scalar_lea.vmem %s0, %s243
          %s245 = smul.u32 8, %s20
        $region40: #{tpu_custom_call.1} parent=35 // pred_fallthru
          _
      $region36: #{tpu_custom_call.1} parent=5 // pred_fallthru
        _
      %p246 = scmp.le.s32.totalorder 1, %s20
      %p247 = scmp.lt.s32.totalorder %s20, 9
      %p248 = pnand %p246, %p247
      %p249 = pneg %p248
      // Predicated region
      $region41: #{tpu_custom_call.1} parent=5 // pred_check
        _
      $region42: #{tpu_custom_call.1} parent=5 // pred_check_branch
        %251 = sbr.rel (%p248) target = $region44
      $region43: #{tpu_custom_call.1} parent=5 // pred_region
        %s252 = ssub.s32 %s20, 1
        %s253 = smul.u32 8, %s25
        %p254 = scmp.lt.s32.totalorder %s253, 63
        %s255 = scalar_select %p254, %s253, 63
        %s256 = smul.addr %s255, 8
        %s257 = scalar_lea.vmem %s0, %s256
        %p258 = pneg %p46
        %p259 = pneg %p43
        %p260 = pneg %p67
        %p261 = pneg %p64
        %p262 = pneg %p88
        %p263 = pneg %p85
        %p264 = pneg %p109
        %p265 = pneg %p106
        %p266 = pneg %p130
        %p267 = pneg %p127
        %p268 = pneg %p151
        %p269 = pneg %p148
        %p270 = pneg %p177
        %p271 = pneg %p174
        %s272 = sand.u32 %s164, 1
        %s273 = scalar_lea.sflag [#allocation3], %s272
        %s274 = sand.u32 %s164, 1
        %s275 = smul.addr %s274, 64
        %s276 = scalar_lea.vmem [#allocation2], %s275
        %p277 = pneg %p203
        %p278 = pneg %p200
        %s279 = sand.u32 %s190, 1
        %s280 = scalar_lea.sflag [#allocation5], %s279
        %s281 = sand.u32 %s190, 1
        %s282 = smul.addr %s281, 64
        %s283 = scalar_lea.vmem [#allocation4], %s282
        %s284 = smul.u32 8, %s25
        %p285 = scmp.lt.s32.totalorder %s284, 63
        %s286 = scalar_select %p285, %s284, 63
        %s287 = smul.addr %s286, 8
        %s288 = scalar_lea.vmem %s0, %s287
        %s289 = smul.u32 8, %s25
        %s290 = smul.u32 8, %s25
        %s291 = smul.u32 8, %s25
        %v293 = vld [vmem:[%s288] sm:$0xff]
        %v294 = vld [vmem:[%s288 + $0x8] sm:$0xff]
        %v295 = vld [vmem:[%s288 + $0x10] sm:$0xff]
        %v296 = vld [vmem:[%s288 + $0x18] sm:$0xff]
        %v297 = vld [vmem:[%s288 + $0x20] sm:$0xff]
        %v298 = vld [vmem:[%s288 + $0x28] sm:$0xff]
        %v299 = vld [vmem:[%s288 + $0x30] sm:$0xff]
        %v300 = vld [vmem:[%s288 + $0x38] sm:$0xff]
        %v301 = vpack.c.bf16 %v294, %v293
        %v302 = vpack.c.bf16 %v296, %v295
        %v303 = vpack.c.bf16 %v298, %v297
        %v304 = vpack.c.bf16 %v300, %v299
        %v305 = vld [vmem:[%s1] sm:$0xff]
        %v306 = vld [vmem:[%s1 + $0x8] sm:$0xff]
        %v307 = vld [vmem:[%s1 + $0x10] sm:$0xff]
        %v308 = vld [vmem:[%s1 + $0x18] sm:$0xff]
        %v309 = vld [vmem:[%s1 + $0x20] sm:$0xff]
        %v310 = vld [vmem:[%s1 + $0x28] sm:$0xff]
        %v311 = vld [vmem:[%s2] sm:$0x3f]
        %v313 = vperm.slane %v311, 0
        %v314 = vperm.slane %v311, 1
        %v315 = vperm.slane %v311, 2
        %v316 = vperm.slane %v311, 3
        %v317 = vperm.slane %v311, 4
        %v318 = vperm.slane %v311, 5
        %v331 = vunpack.c.l.b16 %v305
        %v332 = vunpack.c.h.b16 %v305
        %v333 = vunpack.c.l.b16 %v306
        %v334 = vunpack.c.h.b16 %v306
        %v335 = vunpack.c.l.b16 %v307
        %v336 = vunpack.c.h.b16 %v307
        %v337 = vunpack.c.l.b16 %v308
        %v338 = vunpack.c.h.b16 %v308
        %v339 = vunpack.c.l.b16 %v309
        %v340 = vunpack.c.h.b16 %v309
        %v341 = vunpack.c.l.b16 %v310
        %v342 = vunpack.c.h.b16 %v310
        %v343 = vpack.c.b16 %v337, %v331
        %v344 = vpack.c.b16 %v338, %v332
        %v345 = vpack.c.b16 %v339, %v333
        %v346 = vpack.c.b16 %v340, %v334
        %v347 = vpack.c.b16 %v341, %v335
        %v348 = vpack.c.b16 %v342, %v336
        %vm355 = vcmask 130048
        %v357 = vsel %vm355, %v301, 0
        %v360 = vsel %vm355, %v302, 0
        %v363 = vsel %vm355, %v303, 0
        %v366 = vsel %vm355, %v304, 0
        %368 = vmatpush.bf16.msra.mxu0 0
        %369 = vmatpush.bf16.msra.mxu0 0
        %370 = vmatpush.bf16.msra.mxu0 0
        %371 = vmatpush.bf16.msra.mxu0 0
        %372 = vmatpush.bf16.msra.mxu0 0
        %373 = vmatpush.bf16.msra.mxu0 0
        %374 = vmatpush.bf16.msra.mxu0 0
        %375 = vmatpush.bf16.msra.mxu0 %v343
        %376 = vmatmul.bf16.gmra.mxu0 %v357
        %v377 = vpop.f32.mrf.mxu0
        %v378 = vadd.f32 %v313, %v377
        %v379 = vpop.f32.mrf.mxu0
        %v380 = vadd.f32 %v313, %v379
        %381 = vmatmul.bf16.gmra.mxu0 %v360
        %v382 = vpop.f32.mrf.mxu0
        %v383 = vadd.f32 %v313, %v382
        %v384 = vpop.f32.mrf.mxu0
        %v385 = vadd.f32 %v313, %v384
        %386 = vmatmul.bf16.gmra.mxu0 %v363
        %v387 = vpop.f32.mrf.mxu0
        %v388 = vadd.f32 %v313, %v387
        %v389 = vpop.f32.mrf.mxu0
        %v390 = vadd.f32 %v313, %v389
        %391 = vmatmul.bf16.gmra.mxu0 %v366
        %v392 = vpop.f32.mrf.mxu0
        %v393 = vadd.f32 %v313, %v392
        %v394 = vpop.f32.mrf.mxu0
        %v395 = vadd.f32 %v313, %v394
        %396 = vdwg.mxu0
        %397 = vmatpush.bf16.msra.mxu0 0
        %398 = vmatpush.bf16.msra.mxu0 0
        %399 = vmatpush.bf16.msra.mxu0 0
        %400 = vmatpush.bf16.msra.mxu0 0
        %401 = vmatpush.bf16.msra.mxu0 0
        %402 = vmatpush.bf16.msra.mxu0 0
        %403 = vmatpush.bf16.msra.mxu0 0
        %404 = vmatpush.bf16.msra.mxu0 %v344
        %405 = vmatmul.bf16.gmra.mxu0 %v357
        %v406 = vpop.f32.mrf.mxu0
        %v407 = vadd.f32 %v314, %v406
        %v408 = vpop.f32.mrf.mxu0
        %v409 = vadd.f32 %v314, %v408
        %410 = vmatmul.bf16.gmra.mxu0 %v360
        %v411 = vpop.f32.mrf.mxu0
        %v412 = vadd.f32 %v314, %v411
        %v413 = vpop.f32.mrf.mxu0
        %v414 = vadd.f32 %v314, %v413
        %415 = vmatmul.bf16.gmra.mxu0 %v363
        %v416 = vpop.f32.mrf.mxu0
        %v417 = vadd.f32 %v314, %v416
        %v418 = vpop.f32.mrf.mxu0
        %v419 = vadd.f32 %v314, %v418
        %420 = vmatmul.bf16.gmra.mxu0 %v366
        %v421 = vpop.f32.mrf.mxu0
        %v422 = vadd.f32 %v314, %v421
        %v423 = vpop.f32.mrf.mxu0
        %v424 = vadd.f32 %v314, %v423
        %425 = vdwg.mxu0
        %426 = vmatpush.bf16.msra.mxu0 0
        %427 = vmatpush.bf16.msra.mxu0 0
        %428 = vmatpush.bf16.msra.mxu0 0
        %429 = vmatpush.bf16.msra.mxu0 0
        %430 = vmatpush.bf16.msra.mxu0 0
        %431 = vmatpush.bf16.msra.mxu0 0
        %432 = vmatpush.bf16.msra.mxu0 0
        %433 = vmatpush.bf16.msra.mxu0 %v345
        %434 = vmatmul.bf16.gmra.mxu0 %v357
        %v435 = vpop.f32.mrf.mxu0
        %v436 = vadd.f32 %v315, %v435
        %v437 = vpop.f32.mrf.mxu0
        %v438 = vadd.f32 %v315, %v437
        %439 = vmatmul.bf16.gmra.mxu0 %v360
        %v440 = vpop.f32.mrf.mxu0
        %v441 = vadd.f32 %v315, %v440
        %v442 = vpop.f32.mrf.mxu0
        %v443 = vadd.f32 %v315, %v442
        %444 = vmatmul.bf16.gmra.mxu0 %v363
        %v445 = vpop.f32.mrf.mxu0
        %v446 = vadd.f32 %v315, %v445
        %v447 = vpop.f32.mrf.mxu0
        %v448 = vadd.f32 %v315, %v447
        %449 = vmatmul.bf16.gmra.mxu0 %v366
        %v450 = vpop.f32.mrf.mxu0
        %v451 = vadd.f32 %v315, %v450
        %v452 = vpop.f32.mrf.mxu0
        %v453 = vadd.f32 %v315, %v452
        %454 = vdwg.mxu0
        %455 = vmatpush.bf16.msra.mxu0 0
        %456 = vmatpush.bf16.msra.mxu0 0
        %457 = vmatpush.bf16.msra.mxu0 0
        %458 = vmatpush.bf16.msra.mxu0 0
        %459 = vmatpush.bf16.msra.mxu0 0
        %460 = vmatpush.bf16.msra.mxu0 0
        %461 = vmatpush.bf16.msra.mxu0 0
        %462 = vmatpush.bf16.msra.mxu0 %v346
        %463 = vmatmul.bf16.gmra.mxu0 %v357
        %v464 = vpop.f32.mrf.mxu0
        %v465 = vadd.f32 %v316, %v464
        %v466 = vpop.f32.mrf.mxu0
        %v467 = vadd.f32 %v316, %v466
        %468 = vmatmul.bf16.gmra.mxu0 %v360
        %v469 = vpop.f32.mrf.mxu0
        %v470 = vadd.f32 %v316, %v469
        %v471 = vpop.f32.mrf.mxu0
        %v472 = vadd.f32 %v316, %v471
        %473 = vmatmul.bf16.gmra.mxu0 %v363
        %v474 = vpop.f32.mrf.mxu0
        %v475 = vadd.f32 %v316, %v474
        %v476 = vpop.f32.mrf.mxu0
        %v477 = vadd.f32 %v316, %v476
        %478 = vmatmul.bf16.gmra.mxu0 %v366
        %v479 = vpop.f32.mrf.mxu0
        %v480 = vadd.f32 %v316, %v479
        %v481 = vpop.f32.mrf.mxu0
        %v482 = vadd.f32 %v316, %v481
        %483 = vdwg.mxu0
        %484 = vmatpush.bf16.msra.mxu0 0
        %485 = vmatpush.bf16.msra.mxu0 0
        %486 = vmatpush.bf16.msra.mxu0 0
        %487 = vmatpush.bf16.msra.mxu0 0
        %488 = vmatpush.bf16.msra.mxu0 0
        %489 = vmatpush.bf16.msra.mxu0 0
        %490 = vmatpush.bf16.msra.mxu0 0
        %491 = vmatpush.bf16.msra.mxu0 %v347
        %492 = vmatmul.bf16.gmra.mxu0 %v357
        %v493 = vpop.f32.mrf.mxu0
        %v494 = vadd.f32 %v317, %v493
        %v495 = vpop.f32.mrf.mxu0
        %v496 = vadd.f32 %v317, %v495
        %497 = vmatmul.bf16.gmra.mxu0 %v360
        %v498 = vpop.f32.mrf.mxu0
        %v499 = vadd.f32 %v317, %v498
        %v500 = vpop.f32.mrf.mxu0
        %v501 = vadd.f32 %v317, %v500
        %502 = vmatmul.bf16.gmra.mxu0 %v363
        %v503 = vpop.f32.mrf.mxu0
        %v504 = vadd.f32 %v317, %v503
        %v505 = vpop.f32.mrf.mxu0
        %v506 = vadd.f32 %v317, %v505
        %507 = vmatmul.bf16.gmra.mxu0 %v366
        %v508 = vpop.f32.mrf.mxu0
        %v509 = vadd.f32 %v317, %v508
        %v510 = vpop.f32.mrf.mxu0
        %v511 = vadd.f32 %v317, %v510
        %512 = vdwg.mxu0
        %513 = vmatpush.bf16.msra.mxu0 0
        %514 = vmatpush.bf16.msra.mxu0 0
        %515 = vmatpush.bf16.msra.mxu0 0
        %516 = vmatpush.bf16.msra.mxu0 0
        %517 = vmatpush.bf16.msra.mxu0 0
        %518 = vmatpush.bf16.msra.mxu0 0
        %519 = vmatpush.bf16.msra.mxu0 0
        %520 = vmatpush.bf16.msra.mxu0 %v348
        %521 = vmatmul.bf16.gmra.mxu0 %v357
        %v522 = vpop.f32.mrf.mxu0
        %v523 = vadd.f32 %v318, %v522
        %v524 = vpop.f32.mrf.mxu0
        %v525 = vadd.f32 %v318, %v524
        %526 = vmatmul.bf16.gmra.mxu0 %v360
        %v527 = vpop.f32.mrf.mxu0
        %v528 = vadd.f32 %v318, %v527
        %v529 = vpop.f32.mrf.mxu0
        %v530 = vadd.f32 %v318, %v529
        %531 = vmatmul.bf16.gmra.mxu0 %v363
        %v532 = vpop.f32.mrf.mxu0
        %v533 = vadd.f32 %v318, %v532
        %v534 = vpop.f32.mrf.mxu0
        %v535 = vadd.f32 %v318, %v534
        %536 = vmatmul.bf16.gmra.mxu0 %v366
        %v537 = vpop.f32.mrf.mxu0
        %v538 = vadd.f32 %v318, %v537
        %v539 = vpop.f32.mrf.mxu0
        %v540 = vadd.f32 %v318, %v539
        %541 = vdwg.mxu0
        %v542 = vmax.f32 %v436, %v465
        %543 = vmax.xlane.f32.xlu0 %v542
        %v544 = vpop.xlane.xlu0 %543
        %v545 = vmax.f32 %v438, %v467
        %546 = vmax.xlane.f32.xlu0 %v545
        %v547 = vpop.xlane.xlu0 %546
        %v548 = vmax.f32 %v441, %v470
        %549 = vmax.xlane.f32.xlu0 %v548
        %v550 = vpop.xlane.xlu0 %549
        %v551 = vmax.f32 %v443, %v472
        %552 = vmax.xlane.f32.xlu0 %v551
        %v553 = vpop.xlane.xlu0 %552
        %v554 = vmax.f32 %v446, %v475
        %555 = vmax.xlane.f32.xlu0 %v554
        %v556 = vpop.xlane.xlu0 %555
        %v557 = vmax.f32 %v448, %v477
        %558 = vmax.xlane.f32.xlu0 %v557
        %v559 = vpop.xlane.xlu0 %558
        %v560 = vmax.f32 %v451, %v480
        %561 = vmax.xlane.f32.xlu0 %v560
        %v562 = vpop.xlane.xlu0 %561
        %v563 = vmax.f32 %v453, %v482
        %564 = vmax.xlane.f32.xlu0 %v563
        %v565 = vpop.xlane.xlu0 %564
        %v566 = vmin.f32 %v436, %v465
        %567 = vmin.xlane.f32.xlu0 %v566
        %v568 = vpop.xlane.xlu0 %567
        %v569 = vmin.f32 %v438, %v467
        %570 = vmin.xlane.f32.xlu0 %v569
        %v571 = vpop.xlane.xlu0 %570
        %v572 = vmin.f32 %v441, %v470
        %573 = vmin.xlane.f32.xlu0 %v572
        %v574 = vpop.xlane.xlu0 %573
        %v575 = vmin.f32 %v443, %v472
        %576 = vmin.xlane.f32.xlu0 %v575
        %v577 = vpop.xlane.xlu0 %576
        %v578 = vmin.f32 %v446, %v475
        %579 = vmin.xlane.f32.xlu0 %v578
        %v580 = vpop.xlane.xlu0 %579
        %v581 = vmin.f32 %v448, %v477
        %582 = vmin.xlane.f32.xlu0 %v581
        %v583 = vpop.xlane.xlu0 %582
        %v584 = vmin.f32 %v451, %v480
        %585 = vmin.xlane.f32.xlu0 %v584
        %v586 = vpop.xlane.xlu0 %585
        %v587 = vmin.f32 %v453, %v482
        %588 = vmin.xlane.f32.xlu0 %v587
        %v589 = vpop.xlane.xlu0 %588
        %vm590 = vcmp.ge.f32.partialorder %v378, 0.0
        %vm591 = vcmp.ge.f32.partialorder %v407, 0.0
        %vm592 = vcmp.ge.f32.partialorder %v380, 0.0
        %vm593 = vcmp.ge.f32.partialorder %v409, 0.0
        %vm594 = vcmp.ge.f32.partialorder %v383, 0.0
        %vm595 = vcmp.ge.f32.partialorder %v412, 0.0
        %vm596 = vcmp.ge.f32.partialorder %v385, 0.0
        %vm597 = vcmp.ge.f32.partialorder %v414, 0.0
        %vm598 = vcmp.ge.f32.partialorder %v388, 0.0
        %vm599 = vcmp.ge.f32.partialorder %v417, 0.0
        %vm600 = vcmp.ge.f32.partialorder %v390, 0.0
        %vm601 = vcmp.ge.f32.partialorder %v419, 0.0
        %vm602 = vcmp.ge.f32.partialorder %v393, 0.0
        %vm603 = vcmp.ge.f32.partialorder %v422, 0.0
        %vm604 = vcmp.ge.f32.partialorder %v395, 0.0
        %vm605 = vcmp.ge.f32.partialorder %v424, 0.0
        %v606 = vmul.f32 %v378, %v544
        %v607 = vmul.f32 %v407, %v544
        %v608 = vmul.f32 %v380, %v547
        %v609 = vmul.f32 %v409, %v547
        %v610 = vmul.f32 %v383, %v550
        %v611 = vmul.f32 %v412, %v550
        %v612 = vmul.f32 %v385, %v553
        %v613 = vmul.f32 %v414, %v553
        %v614 = vmul.f32 %v388, %v556
        %v615 = vmul.f32 %v417, %v556
        %v616 = vmul.f32 %v390, %v559
        %v617 = vmul.f32 %v419, %v559
        %v618 = vmul.f32 %v393, %v562
        %v619 = vmul.f32 %v422, %v562
        %v620 = vmul.f32 %v395, %v565
        %v621 = vmul.f32 %v424, %v565
        %v622 = vmul.f32 %v378, %v568
        %v623 = vmul.f32 %v407, %v568
        %v624 = vmul.f32 %v380, %v571
        %v625 = vmul.f32 %v409, %v571
        %v626 = vmul.f32 %v383, %v574
        %v627 = vmul.f32 %v412, %v574
        %v628 = vmul.f32 %v385, %v577
        %v629 = vmul.f32 %v414, %v577
        %v630 = vmul.f32 %v388, %v580
        %v631 = vmul.f32 %v417, %v580
        %v632 = vmul.f32 %v390, %v583
        %v633 = vmul.f32 %v419, %v583
        %v634 = vmul.f32 %v393, %v586
        %v635 = vmul.f32 %v422, %v586
        %v636 = vmul.f32 %v395, %v589
        %v637 = vmul.f32 %v424, %v589
        %v638 = vsel %vm590, %v606, %v622
        %v639 = vsel %vm591, %v607, %v623
        %v640 = vsel %vm592, %v608, %v624
        %v641 = vsel %vm593, %v609, %v625
        %v642 = vsel %vm594, %v610, %v626
        %v643 = vsel %vm595, %v611, %v627
        %v644 = vsel %vm596, %v612, %v628
        %v645 = vsel %vm597, %v613, %v629
        %v646 = vsel %vm598, %v614, %v630
        %v647 = vsel %vm599, %v615, %v631
        %v648 = vsel %vm600, %v616, %v632
        %v649 = vsel %vm601, %v617, %v633
        %v650 = vsel %vm602, %v618, %v634
        %v651 = vsel %vm603, %v619, %v635
        %v652 = vsel %vm604, %v620, %v636
        %v653 = vsel %vm605, %v621, %v637
        %v654 = vmul.f32 %v378, %v436
        %v655 = vmul.f32 %v407, %v465
        %v656 = vmul.f32 %v380, %v438
        %v657 = vmul.f32 %v409, %v467
        %v658 = vmul.f32 %v383, %v441
        %v659 = vmul.f32 %v412, %v470
        %v660 = vmul.f32 %v385, %v443
        %v661 = vmul.f32 %v414, %v472
        %v662 = vmul.f32 %v388, %v446
        %v663 = vmul.f32 %v417, %v475
        %v664 = vmul.f32 %v390, %v448
        %v665 = vmul.f32 %v419, %v477
        %v666 = vmul.f32 %v393, %v451
        %v667 = vmul.f32 %v422, %v480
        %v668 = vmul.f32 %v395, %v453
        %v669 = vmul.f32 %v424, %v482
        %v670 = vsub.f32 %v654, %v638
        %v671 = vsub.f32 %v655, %v639
        %v672 = vsub.f32 %v656, %v640
        %v673 = vsub.f32 %v657, %v641
        %v674 = vsub.f32 %v658, %v642
        %v675 = vsub.f32 %v659, %v643
        %v676 = vsub.f32 %v660, %v644
        %v677 = vsub.f32 %v661, %v645
        %v678 = vsub.f32 %v662, %v646
        %v679 = vsub.f32 %v663, %v647
        %v680 = vsub.f32 %v664, %v648
        %v681 = vsub.f32 %v665, %v649
        %v682 = vsub.f32 %v666, %v650
        %v683 = vsub.f32 %v667, %v651
        %v684 = vsub.f32 %v668, %v652
        %v685 = vsub.f32 %v669, %v653
        %v686 = vmul.f32 %v670, 1.442695
        %v687 = vpow.pop %v686
        %v688 = vmul.f32 %v671, 1.442695
        %v689 = vpow.pop %v688
        %v690 = vmul.f32 %v672, 1.442695
        %v691 = vpow.pop %v690
        %v692 = vmul.f32 %v673, 1.442695
        %v693 = vpow.pop %v692
        %v694 = vmul.f32 %v674, 1.442695
        %v695 = vpow.pop %v694
        %v696 = vmul.f32 %v675, 1.442695
        %v697 = vpow.pop %v696
        %v698 = vmul.f32 %v676, 1.442695
        %v699 = vpow.pop %v698
        %v700 = vmul.f32 %v677, 1.442695
        %v701 = vpow.pop %v700
        %v702 = vmul.f32 %v678, 1.442695
        %v703 = vpow.pop %v702
        %v704 = vmul.f32 %v679, 1.442695
        %v705 = vpow.pop %v704
        %v706 = vmul.f32 %v680, 1.442695
        %v707 = vpow.pop %v706
        %v708 = vmul.f32 %v681, 1.442695
        %v709 = vpow.pop %v708
        %v710 = vmul.f32 %v682, 1.442695
        %v711 = vpow.pop %v710
        %v712 = vmul.f32 %v683, 1.442695
        %v713 = vpow.pop %v712
        %v714 = vmul.f32 %v684, 1.442695
        %v715 = vpow.pop %v714
        %v716 = vmul.f32 %v685, 1.442695
        %v717 = vpow.pop %v716
        %v718 = vpack.c.bf16 %v691, %v687
        %v719 = vpack.c.bf16 %v693, %v689
        %v720 = vpack.c.bf16 %v699, %v695
        %v721 = vpack.c.bf16 %v701, %v697
        %v722 = vpack.c.bf16 %v707, %v703
        %v723 = vpack.c.bf16 %v709, %v705
        %v724 = vpack.c.bf16 %v715, %v711
        %v725 = vpack.c.bf16 %v717, %v713
        %v726 = vld [vmem:[%s3] sm:$0xff]
        %v727 = vld [vmem:[%s3 + $0x8] sm:$0xff]
        %v728 = vld [vmem:[%s3 + $0x10] sm:$0xff]
        %v729 = vld [vmem:[%s3 + $0x18] sm:$0xff]
        %v730 = vld [vmem:[%s3 + $0x20] sm:$0xff]
        %v731 = vld [vmem:[%s3 + $0x28] sm:$0xff]
        %v732 = vld [vmem:[%s3 + $0x30] sm:$0xff]
        %v733 = vld [vmem:[%s3 + $0x38] sm:$0xff]
        %v734 = vld [vmem:[%s3 + $0x40] sm:$0xff]
        %v735 = vld [vmem:[%s3 + $0x48] sm:$0xff]
        %v736 = vld [vmem:[%s3 + $0x50] sm:$0xff]
        %v737 = vld [vmem:[%s3 + $0x58] sm:$0xff]
        %v738 = vld [vmem:[%s3 + $0x60] sm:$0xff]
        %v739 = vld [vmem:[%s3 + $0x68] sm:$0xff]
        %v740 = vld [vmem:[%s3 + $0x70] sm:$0xff]
        %v741 = vld [vmem:[%s3 + $0x78] sm:$0xff]
        %v742 = vld [vmem:[%s3 + $0x80] sm:$0xff]
        %v743 = vld [vmem:[%s3 + $0x88] sm:$0xff]
        %v744 = vld [vmem:[%s3 + $0x90] sm:$0xff]
        %v745 = vld [vmem:[%s3 + $0x98] sm:$0xff]
        %v746 = vld [vmem:[%s3 + $0xa0] sm:$0xff]
        %v747 = vld [vmem:[%s3 + $0xa8] sm:$0xff]
        %v748 = vld [vmem:[%s3 + $0xb0] sm:$0xff]
        %v749 = vld [vmem:[%s3 + $0xb8] sm:$0xff]
        %v750 = vld [vmem:[%s3 + $0xc0] sm:$0xff]
        %v751 = vld [vmem:[%s3 + $0xc8] sm:$0xff]
        %v752 = vld [vmem:[%s3 + $0xd0] sm:$0xff]
        %v753 = vld [vmem:[%s3 + $0xd8] sm:$0xff]
        %v754 = vld [vmem:[%s3 + $0xe0] sm:$0xff]
        %v755 = vld [vmem:[%s3 + $0xe8] sm:$0xff]
        %v756 = vld [vmem:[%s3 + $0xf0] sm:$0xff]
        %v757 = vld [vmem:[%s3 + $0xf8] sm:$0xff]
        %v790 = vunpack.c.l.b16 %v726
        %v791 = vunpack.c.h.b16 %v726
        %v792 = vunpack.c.l.b16 %v727
        %v793 = vunpack.c.h.b16 %v727
        %v794 = vunpack.c.l.b16 %v728
        %v795 = vunpack.c.h.b16 %v728
        %v796 = vunpack.c.l.b16 %v729
        %v797 = vunpack.c.h.b16 %v729
        %v798 = vunpack.c.l.b16 %v730
        %v799 = vunpack.c.h.b16 %v730
        %v800 = vunpack.c.l.b16 %v731
        %v801 = vunpack.c.h.b16 %v731
        %v802 = vunpack.c.l.b16 %v732
        %v803 = vunpack.c.h.b16 %v732
        %v804 = vunpack.c.l.b16 %v733
        %v805 = vunpack.c.h.b16 %v733
        %v806 = vunpack.c.l.b16 %v734
        %v807 = vunpack.c.h.b16 %v734
        %v808 = vunpack.c.l.b16 %v735
        %v809 = vunpack.c.h.b16 %v735
        %v810 = vunpack.c.l.b16 %v736
        %v811 = vunpack.c.h.b16 %v736
        %v812 = vunpack.c.l.b16 %v737
        %v813 = vunpack.c.h.b16 %v737
        %v814 = vunpack.c.l.b16 %v738
        %v815 = vunpack.c.h.b16 %v738
        %v816 = vunpack.c.l.b16 %v739
        %v817 = vunpack.c.h.b16 %v739
        %v818 = vunpack.c.l.b16 %v740
        %v819 = vunpack.c.h.b16 %v740
        %v820 = vunpack.c.l.b16 %v741
        %v821 = vunpack.c.h.b16 %v741
        %v822 = vunpack.c.l.b16 %v742
        %v823 = vunpack.c.h.b16 %v742
        %v824 = vunpack.c.l.b16 %v743
        %v825 = vunpack.c.h.b16 %v743
        %v826 = vunpack.c.l.b16 %v744
        %v827 = vunpack.c.h.b16 %v744
        %v828 = vunpack.c.l.b16 %v745
        %v829 = vunpack.c.h.b16 %v745
        %v830 = vunpack.c.l.b16 %v746
        %v831 = vunpack.c.h.b16 %v746
        %v832 = vunpack.c.l.b16 %v747
        %v833 = vunpack.c.h.b16 %v747
        %v834 = vunpack.c.l.b16 %v748
        %v835 = vunpack.c.h.b16 %v748
        %v836 = vunpack.c.l.b16 %v749
        %v837 = vunpack.c.h.b16 %v749
        %v838 = vunpack.c.l.b16 %v750
        %v839 = vunpack.c.h.b16 %v750
        %v840 = vunpack.c.l.b16 %v751
        %v841 = vunpack.c.h.b16 %v751
        %v842 = vunpack.c.l.b16 %v752
        %v843 = vunpack.c.h.b16 %v752
        %v844 = vunpack.c.l.b16 %v753
        %v845 = vunpack.c.h.b16 %v753
        %v846 = vunpack.c.l.b16 %v754
        %v847 = vunpack.c.h.b16 %v754
        %v848 = vunpack.c.l.b16 %v755
        %v849 = vunpack.c.h.b16 %v755
        %v850 = vunpack.c.l.b16 %v756
        %v851 = vunpack.c.h.b16 %v756
        %v852 = vunpack.c.l.b16 %v757
        %v853 = vunpack.c.h.b16 %v757
        %v854 = vpack.c.b16 %v792, %v790
        %v855 = vpack.c.b16 %v793, %v791
        %v856 = vpack.c.b16 %v796, %v794
        %v857 = vpack.c.b16 %v797, %v795
        %v858 = vpack.c.b16 %v800, %v798
        %v859 = vpack.c.b16 %v801, %v799
        %v860 = vpack.c.b16 %v804, %v802
        %v861 = vpack.c.b16 %v805, %v803
        %v862 = vpack.c.b16 %v808, %v806
        %v863 = vpack.c.b16 %v809, %v807
        %v864 = vpack.c.b16 %v812, %v810
        %v865 = vpack.c.b16 %v813, %v811
        %v866 = vpack.c.b16 %v816, %v814
        %v867 = vpack.c.b16 %v817, %v815
        %v868 = vpack.c.b16 %v820, %v818
        %v869 = vpack.c.b16 %v821, %v819
        %v870 = vpack.c.b16 %v824, %v822
        %v871 = vpack.c.b16 %v825, %v823
        %v872 = vpack.c.b16 %v828, %v826
        %v873 = vpack.c.b16 %v829, %v827
        %v874 = vpack.c.b16 %v832, %v830
        %v875 = vpack.c.b16 %v833, %v831
        %v876 = vpack.c.b16 %v836, %v834
        %v877 = vpack.c.b16 %v837, %v835
        %v878 = vpack.c.b16 %v840, %v838
        %v879 = vpack.c.b16 %v841, %v839
        %v880 = vpack.c.b16 %v844, %v842
        %v881 = vpack.c.b16 %v845, %v843
        %v882 = vpack.c.b16 %v848, %v846
        %v883 = vpack.c.b16 %v849, %v847
        %v884 = vpack.c.b16 %v852, %v850
        %v885 = vpack.c.b16 %v853, %v851
        %918 = vmatpush.bf16.msra.mxu0 %v868
        %919 = vmatpush.bf16.msra.mxu0 %v866
        %920 = vmatpush.bf16.msra.mxu0 %v864
        %921 = vmatpush.bf16.msra.mxu0 %v862
        %922 = vmatpush.bf16.msra.mxu0 %v860
        %923 = vmatpush.bf16.msra.mxu0 %v858
        %924 = vmatpush.bf16.msra.mxu0 %v856
        %925 = vmatpush.bf16.msra.mxu0 %v854
        %926 = vmatmul.bf16.gmra.mxu0 %v718
        %v927 = vpop.f32.mrf.mxu0
        %v928 = vadd.f32 0.0, %v927
        %v929 = vpop.f32.mrf.mxu0
        %v930 = vadd.f32 0.0, %v929
        %931 = vmatmul.bf16.gmra.mxu0 %v720
        %v932 = vpop.f32.mrf.mxu0
        %v933 = vadd.f32 0.0, %v932
        %v934 = vpop.f32.mrf.mxu0
        %v935 = vadd.f32 0.0, %v934
        %936 = vmatmul.bf16.gmra.mxu0 %v722
        %v937 = vpop.f32.mrf.mxu0
        %v938 = vadd.f32 0.0, %v937
        %v939 = vpop.f32.mrf.mxu0
        %v940 = vadd.f32 0.0, %v939
        %941 = vmatmul.bf16.gmra.mxu0 %v724
        %v942 = vpop.f32.mrf.mxu0
        %v943 = vadd.f32 0.0, %v942
        %v944 = vpop.f32.mrf.mxu0
        %v945 = vadd.f32 0.0, %v944
        %946 = vdwg.mxu0
        %947 = vmatpush.bf16.msra.mxu0 %v884
        %948 = vmatpush.bf16.msra.mxu0 %v882
        %949 = vmatpush.bf16.msra.mxu0 %v880
        %950 = vmatpush.bf16.msra.mxu0 %v878
        %951 = vmatpush.bf16.msra.mxu0 %v876
        %952 = vmatpush.bf16.msra.mxu0 %v874
        %953 = vmatpush.bf16.msra.mxu0 %v872
        %954 = vmatpush.bf16.msra.mxu0 %v870
        %955 = vmatmul.bf16.gmra.mxu0 %v719
        %v956 = vpop.f32.mrf.mxu0
        %v957 = vadd.f32 %v928, %v956
        %v958 = vpop.f32.mrf.mxu0
        %v959 = vadd.f32 %v930, %v958
        %960 = vmatmul.bf16.gmra.mxu0 %v721
        %v961 = vpop.f32.mrf.mxu0
        %v962 = vadd.f32 %v933, %v961
        %v963 = vpop.f32.mrf.mxu0
        %v964 = vadd.f32 %v935, %v963
        %965 = vmatmul.bf16.gmra.mxu0 %v723
        %v966 = vpop.f32.mrf.mxu0
        %v967 = vadd.f32 %v938, %v966
        %v968 = vpop.f32.mrf.mxu0
        %v969 = vadd.f32 %v940, %v968
        %970 = vmatmul.bf16.gmra.mxu0 %v725
        %v971 = vpop.f32.mrf.mxu0
        %v972 = vadd.f32 %v943, %v971
        %v973 = vpop.f32.mrf.mxu0
        %v974 = vadd.f32 %v945, %v973
        %975 = vdwg.mxu0
        %976 = vmatpush.bf16.msra.mxu0 %v869
        %977 = vmatpush.bf16.msra.mxu0 %v867
        %978 = vmatpush.bf16.msra.mxu0 %v865
        %979 = vmatpush.bf16.msra.mxu0 %v863
        %980 = vmatpush.bf16.msra.mxu0 %v861
        %981 = vmatpush.bf16.msra.mxu0 %v859
        %982 = vmatpush.bf16.msra.mxu0 %v857
        %983 = vmatpush.bf16.msra.mxu0 %v855
        %984 = vmatmul.bf16.gmra.mxu0 %v718
        %v985 = vpop.f32.mrf.mxu0
        %v986 = vadd.f32 0.0, %v985
        %v987 = vpop.f32.mrf.mxu0
        %v988 = vadd.f32 0.0, %v987
        %989 = vmatmul.bf16.gmra.mxu0 %v720
        %v990 = vpop.f32.mrf.mxu0
        %v991 = vadd.f32 0.0, %v990
        %v992 = vpop.f32.mrf.mxu0
        %v993 = vadd.f32 0.0, %v992
        %994 = vmatmul.bf16.gmra.mxu0 %v722
        %v995 = vpop.f32.mrf.mxu0
        %v996 = vadd.f32 0.0, %v995
        %v997 = vpop.f32.mrf.mxu0
        %v998 = vadd.f32 0.0, %v997
        %999 = vmatmul.bf16.gmra.mxu0 %v724
        %v1000 = vpop.f32.mrf.mxu0
        %v1001 = vadd.f32 0.0, %v1000
        %v1002 = vpop.f32.mrf.mxu0
        %v1003 = vadd.f32 0.0, %v1002
        %1004 = vdwg.mxu0
        %1005 = vmatpush.bf16.msra.mxu0 %v885
        %1006 = vmatpush.bf16.msra.mxu0 %v883
        %1007 = vmatpush.bf16.msra.mxu0 %v881
        %1008 = vmatpush.bf16.msra.mxu0 %v879
        %1009 = vmatpush.bf16.msra.mxu0 %v877
        %1010 = vmatpush.bf16.msra.mxu0 %v875
        %1011 = vmatpush.bf16.msra.mxu0 %v873
        %1012 = vmatpush.bf16.msra.mxu0 %v871
        %1013 = vmatmul.bf16.gmra.mxu0 %v719
        %v1014 = vpop.f32.mrf.mxu0
        %v1015 = vadd.f32 %v986, %v1014
        %v1016 = vpop.f32.mrf.mxu0
        %v1017 = vadd.f32 %v988, %v1016
        %1018 = vmatmul.bf16.gmra.mxu0 %v721
        %v1019 = vpop.f32.mrf.mxu0
        %v1020 = vadd.f32 %v991, %v1019
        %v1021 = vpop.f32.mrf.mxu0
        %v1022 = vadd.f32 %v993, %v1021
        %1023 = vmatmul.bf16.gmra.mxu0 %v723
        %v1024 = vpop.f32.mrf.mxu0
        %v1025 = vadd.f32 %v996, %v1024
        %v1026 = vpop.f32.mrf.mxu0
        %v1027 = vadd.f32 %v998, %v1026
        %1028 = vmatmul.bf16.gmra.mxu0 %v725
        %v1029 = vpop.f32.mrf.mxu0
        %v1030 = vadd.f32 %v1001, %v1029
        %v1031 = vpop.f32.mrf.mxu0
        %v1032 = vadd.f32 %v1003, %v1031
        %1033 = vdwg.mxu0
        %v1034 = vrcp.pop %v957
        %v1035 = vrcp.pop %v1015
        %v1036 = vrcp.pop %v959
        %v1037 = vrcp.pop %v1017
        %v1038 = vrcp.pop %v962
        %v1039 = vrcp.pop %v1020
        %v1040 = vrcp.pop %v964
        %v1041 = vrcp.pop %v1022
        %v1042 = vrcp.pop %v967
        %v1043 = vrcp.pop %v1025
        %v1044 = vrcp.pop %v969
        %v1045 = vrcp.pop %v1027
        %v1046 = vrcp.pop %v972
        %v1047 = vrcp.pop %v1030
        %v1048 = vrcp.pop %v974
        %v1049 = vrcp.pop %v1032
        %v1050 = vmul.f32 %v687, %v1034
        %v1051 = vmul.f32 %v689, %v1035
        %v1052 = vmul.f32 %v691, %v1036
        %v1053 = vmul.f32 %v693, %v1037
        %v1054 = vmul.f32 %v695, %v1038
        %v1055 = vmul.f32 %v697, %v1039
        %v1056 = vmul.f32 %v699, %v1040
        %v1057 = vmul.f32 %v701, %v1041
        %v1058 = vmul.f32 %v703, %v1042
        %v1059 = vmul.f32 %v705, %v1043
        %v1060 = vmul.f32 %v707, %v1044
        %v1061 = vmul.f32 %v709, %v1045
        %v1062 = vmul.f32 %v711, %v1046
        %v1063 = vmul.f32 %v713, %v1047
        %v1064 = vmul.f32 %v715, %v1048
        %v1065 = vmul.f32 %v717, %v1049
        %v1066 = vpack.c.bf16 %v1051, %v1050
        %v1067 = vpack.c.bf16 %v1053, %v1052
        %v1068 = vpack.c.bf16 %v1055, %v1054
        %v1069 = vpack.c.bf16 %v1057, %v1056
        %v1070 = vpack.c.bf16 %v1059, %v1058
        %v1071 = vpack.c.bf16 %v1061, %v1060
        %v1072 = vpack.c.bf16 %v1063, %v1062
        %v1073 = vpack.c.bf16 %v1065, %v1064
        %1074 = vst [vmem:[%s283] sm:$0xff] %v1066
        %1075 = vst [vmem:[%s283 + $0x8] sm:$0xff] %v1067
        %1076 = vst [vmem:[%s283 + $0x10] sm:$0xff] %v1068
        %1077 = vst [vmem:[%s283 + $0x18] sm:$0xff] %v1069
        %1078 = vst [vmem:[%s283 + $0x20] sm:$0xff] %v1070
        %1079 = vst [vmem:[%s283 + $0x28] sm:$0xff] %v1071
        %1080 = vst [vmem:[%s283 + $0x30] sm:$0xff] %v1072
        %1081 = vst [vmem:[%s283 + $0x38] sm:$0xff] %v1073
        %v1082 = vmul.f32 %v1050, %v494
        %v1083 = vmul.f32 %v1051, %v523
        %v1084 = vmul.f32 %v1052, %v496
        %v1085 = vmul.f32 %v1053, %v525
        %v1086 = vmul.f32 %v1054, %v499
        %v1087 = vmul.f32 %v1055, %v528
        %v1088 = vmul.f32 %v1056, %v501
        %v1089 = vmul.f32 %v1057, %v530
        %v1090 = vmul.f32 %v1058, %v504
        %v1091 = vmul.f32 %v1059, %v533
        %v1092 = vmul.f32 %v1060, %v506
        %v1093 = vmul.f32 %v1061, %v535
        %v1094 = vmul.f32 %v1062, %v509
        %v1095 = vmul.f32 %v1063, %v538
        %v1096 = vmul.f32 %v1064, %v511
        %v1097 = vmul.f32 %v1065, %v540
        %v1098 = vpack.c.bf16 %v1084, %v1082
        %v1099 = vpack.c.bf16 %v1085, %v1083
        %v1100 = vpack.c.bf16 %v1088, %v1086
        %v1101 = vpack.c.bf16 %v1089, %v1087
        %v1102 = vpack.c.bf16 %v1092, %v1090
        %v1103 = vpack.c.bf16 %v1093, %v1091
        %v1104 = vpack.c.bf16 %v1096, %v1094
        %v1105 = vpack.c.bf16 %v1097, %v1095
        %v1106 = vld [vmem:[%s4] sm:$0xf]
        %v1107 = vld [vmem:[%s4 + $0x4] sm:$0xf]
        %v1108 = vld [vmem:[%s4 + $0x8] sm:$0xf]
        %v1109 = vld [vmem:[%s4 + $0xc] sm:$0xf]
        %v1110 = vld [vmem:[%s4 + $0x10] sm:$0xf]
        %v1111 = vld [vmem:[%s4 + $0x14] sm:$0xf]
        %v1112 = vld [vmem:[%s4 + $0x18] sm:$0xf]
        %v1113 = vld [vmem:[%s4 + $0x1c] sm:$0xf]
        %v1114 = vld [vmem:[%s4 + $0x20] sm:$0xf]
        %v1115 = vld [vmem:[%s4 + $0x24] sm:$0xf]
        %v1116 = vld [vmem:[%s4 + $0x28] sm:$0xf]
        %v1117 = vld [vmem:[%s4 + $0x2c] sm:$0xf]
        %v1118 = vld [vmem:[%s4 + $0x30] sm:$0xf]
        %v1119 = vld [vmem:[%s4 + $0x34] sm:$0xf]
        %v1120 = vld [vmem:[%s4 + $0x38] sm:$0xf]
        %v1121 = vld [vmem:[%s4 + $0x3c] sm:$0xf]
        %v1122 = vld [vmem:[%s4 + $0x40] sm:$0xf]
        %v1123 = vld [vmem:[%s4 + $0x44] sm:$0xf]
        %v1124 = vld [vmem:[%s4 + $0x48] sm:$0xf]
        %v1125 = vld [vmem:[%s4 + $0x4c] sm:$0xf]
        %v1126 = vld [vmem:[%s4 + $0x50] sm:$0xf]
        %v1127 = vld [vmem:[%s4 + $0x54] sm:$0xf]
        %v1128 = vld [vmem:[%s4 + $0x58] sm:$0xf]
        %v1129 = vld [vmem:[%s4 + $0x5c] sm:$0xf]
        %v1130 = vld [vmem:[%s4 + $0x60] sm:$0xf]
        %v1131 = vld [vmem:[%s4 + $0x64] sm:$0xf]
        %v1132 = vld [vmem:[%s4 + $0x68] sm:$0xf]
        %v1133 = vld [vmem:[%s4 + $0x6c] sm:$0xf]
        %v1134 = vld [vmem:[%s4 + $0x70] sm:$0xf]
        %v1135 = vld [vmem:[%s4 + $0x74] sm:$0xf]
        %v1136 = vld [vmem:[%s4 + $0x78] sm:$0xf]
        %v1137 = vld [vmem:[%s4 + $0x7c] sm:$0xf]
        %v1138 = vld [vmem:[%s5] sm:$0x1]
        %v1140 = vperm.slane %v1138, 0
        %v1174 = vunpack.c.l.b16 %v1106
        %v1175 = vunpack.c.l.b16 %v1107
        %v1176 = vunpack.c.l.b16 %v1108
        %v1177 = vunpack.c.l.b16 %v1109
        %v1178 = vunpack.c.l.b16 %v1110
        %v1179 = vunpack.c.l.b16 %v1111
        %v1180 = vunpack.c.l.b16 %v1112
        %v1181 = vunpack.c.l.b16 %v1113
        %v1182 = vunpack.c.l.b16 %v1114
        %v1183 = vunpack.c.l.b16 %v1115
        %v1184 = vunpack.c.l.b16 %v1116
        %v1185 = vunpack.c.l.b16 %v1117
        %v1186 = vunpack.c.l.b16 %v1118
        %v1187 = vunpack.c.l.b16 %v1119
        %v1188 = vunpack.c.l.b16 %v1120
        %v1189 = vunpack.c.l.b16 %v1121
        %v1190 = vunpack.c.l.b16 %v1122
        %v1191 = vunpack.c.l.b16 %v1123
        %v1192 = vunpack.c.l.b16 %v1124
        %v1193 = vunpack.c.l.b16 %v1125
        %v1194 = vunpack.c.l.b16 %v1126
        %v1195 = vunpack.c.l.b16 %v1127
        %v1196 = vunpack.c.l.b16 %v1128
        %v1197 = vunpack.c.l.b16 %v1129
        %v1198 = vunpack.c.l.b16 %v1130
        %v1199 = vunpack.c.l.b16 %v1131
        %v1200 = vunpack.c.l.b16 %v1132
        %v1201 = vunpack.c.l.b16 %v1133
        %v1202 = vunpack.c.l.b16 %v1134
        %v1203 = vunpack.c.l.b16 %v1135
        %v1204 = vunpack.c.l.b16 %v1136
        %v1205 = vunpack.c.l.b16 %v1137
        %v1206 = vpack.c.b16 %v1175, %v1174
        %v1207 = vpack.c.b16 %v1177, %v1176
        %v1208 = vpack.c.b16 %v1179, %v1178
        %v1209 = vpack.c.b16 %v1181, %v1180
        %v1210 = vpack.c.b16 %v1183, %v1182
        %v1211 = vpack.c.b16 %v1185, %v1184
        %v1212 = vpack.c.b16 %v1187, %v1186
        %v1213 = vpack.c.b16 %v1189, %v1188
        %v1214 = vpack.c.b16 %v1191, %v1190
        %v1215 = vpack.c.b16 %v1193, %v1192
        %v1216 = vpack.c.b16 %v1195, %v1194
        %v1217 = vpack.c.b16 %v1197, %v1196
        %v1218 = vpack.c.b16 %v1199, %v1198
        %v1219 = vpack.c.b16 %v1201, %v1200
        %v1220 = vpack.c.b16 %v1203, %v1202
        %v1221 = vpack.c.b16 %v1205, %v1204
        %1238 = vmatpush.bf16.msra.mxu0 %v1213
        %1239 = vmatpush.bf16.msra.mxu0 %v1212
        %1240 = vmatpush.bf16.msra.mxu0 %v1211
        %1241 = vmatpush.bf16.msra.mxu0 %v1210
        %1242 = vmatpush.bf16.msra.mxu0 %v1209
        %1243 = vmatpush.bf16.msra.mxu0 %v1208
        %1244 = vmatpush.bf16.msra.mxu0 %v1207
        %1245 = vmatpush.bf16.msra.mxu0 %v1206
        %1246 = vmatmul.bf16.gmra.mxu0 %v1098
        %v1247 = vpop.f32.mrf.mxu0
        %v1248 = vadd.f32 %v1140, %v1247
        %v1249 = vpop.f32.mrf.mxu0
        %v1250 = vadd.f32 %v1140, %v1249
        %1251 = vmatmul.bf16.gmra.mxu0 %v1100
        %v1252 = vpop.f32.mrf.mxu0
        %v1253 = vadd.f32 %v1140, %v1252
        %v1254 = vpop.f32.mrf.mxu0
        %v1255 = vadd.f32 %v1140, %v1254
        %1256 = vmatmul.bf16.gmra.mxu0 %v1102
        %v1257 = vpop.f32.mrf.mxu0
        %v1258 = vadd.f32 %v1140, %v1257
        %v1259 = vpop.f32.mrf.mxu0
        %v1260 = vadd.f32 %v1140, %v1259
        %1261 = vmatmul.bf16.gmra.mxu0 %v1104
        %v1262 = vpop.f32.mrf.mxu0
        %v1263 = vadd.f32 %v1140, %v1262
        %v1264 = vpop.f32.mrf.mxu0
        %v1265 = vadd.f32 %v1140, %v1264
        %1266 = vdwg.mxu0
        %1267 = vmatpush.bf16.msra.mxu0 %v1221
        %1268 = vmatpush.bf16.msra.mxu0 %v1220
        %1269 = vmatpush.bf16.msra.mxu0 %v1219
        %1270 = vmatpush.bf16.msra.mxu0 %v1218
        %1271 = vmatpush.bf16.msra.mxu0 %v1217
        %1272 = vmatpush.bf16.msra.mxu0 %v1216
        %1273 = vmatpush.bf16.msra.mxu0 %v1215
        %1274 = vmatpush.bf16.msra.mxu0 %v1214
        %1275 = vmatmul.bf16.gmra.mxu0 %v1099
        %v1276 = vpop.f32.mrf.mxu0
        %v1277 = vadd.f32 %v1248, %v1276
        %v1278 = vpop.f32.mrf.mxu0
        %v1279 = vadd.f32 %v1250, %v1278
        %1280 = vmatmul.bf16.gmra.mxu0 %v1101
        %v1281 = vpop.f32.mrf.mxu0
        %v1282 = vadd.f32 %v1253, %v1281
        %v1283 = vpop.f32.mrf.mxu0
        %v1284 = vadd.f32 %v1255, %v1283
        %1285 = vmatmul.bf16.gmra.mxu0 %v1103
        %v1286 = vpop.f32.mrf.mxu0
        %v1287 = vadd.f32 %v1258, %v1286
        %v1288 = vpop.f32.mrf.mxu0
        %v1289 = vadd.f32 %v1260, %v1288
        %1290 = vmatmul.bf16.gmra.mxu0 %v1105
        %v1291 = vpop.f32.mrf.mxu0
        %v1292 = vadd.f32 %v1263, %v1291
        %v1293 = vpop.f32.mrf.mxu0
        %v1294 = vadd.f32 %v1265, %v1293
        %1295 = vdwg.mxu0
        %v1296 = vmax.f32 %v1277, 0.0
        %v1297 = vmax.f32 %v1279, 0.0
        %v1298 = vmax.f32 %v1282, 0.0
        %v1299 = vmax.f32 %v1284, 0.0
        %v1300 = vmax.f32 %v1287, 0.0
        %v1301 = vmax.f32 %v1289, 0.0
        %v1302 = vmax.f32 %v1292, 0.0
        %v1303 = vmax.f32 %v1294, 0.0
        %1304 = vst [vmem:[%s276] sm:$0xff] %v1296
        %1305 = vst [vmem:[%s276 + $0x8] sm:$0xff] %v1297
        %1306 = vst [vmem:[%s276 + $0x10] sm:$0xff] %v1298
        %1307 = vst [vmem:[%s276 + $0x18] sm:$0xff] %v1299
        %1308 = vst [vmem:[%s276 + $0x20] sm:$0xff] %v1300
        %1309 = vst [vmem:[%s276 + $0x28] sm:$0xff] %v1301
        %1310 = vst [vmem:[%s276 + $0x30] sm:$0xff] %v1302
        %1311 = vst [vmem:[%s276 + $0x38] sm:$0xff] %v1303
        %s1312 = sand.u32 %s164, 1
        %s1313 = scalar_lea.sflag [#allocation3], %s1312
        %s1314 = sand.u32 %s164, 1
        %s1315 = smul.addr %s1314, 64
        %s1316 = scalar_lea.vmem [#allocation2], %s1315
        %s1317 = sand.u32 %s190, 1
        %s1318 = scalar_lea.sflag [#allocation5], %s1317
        %s1319 = sand.u32 %s190, 1
        %s1320 = smul.addr %s1319, 64
        %s1321 = scalar_lea.vmem [#allocation4], %s1320
        // Predicated region
        $region45: #{tpu_custom_call.1} parent=43 // pred_check
          %p1322 = pneg %p174
        $region46: #{tpu_custom_call.1} parent=43 // pred_check_branch
          %1324 = sbr.rel (%p1322) target = $region48
        $region47: #{tpu_custom_call.1} parent=43 // pred_region
          %s1325 = smul.u32 8, %s25
          %1327 = vsyncadd %s1313, 0
          %s1328 = smul.addr %s1325, 8
          %s1329 = scalar_lea.hbm %s6, %s1328
          %s1330 = sshll.u32 %s1316, 4
          %s1331 = int_to_ptr.vmem [resolvable:$true] %s1330
          %s1332 = sshll.u32 %s1329, 4
          %s1333 = int_to_ptr.hbm [resolvable:$true] %s1332
          %1338 = dma.vmem_to_hbm [thread:$0]  %s1331, 1024, %s1333, %s1313, 128, 128, 8
        $region48: #{tpu_custom_call.1} parent=43 // pred_fallthru
          _
        // Predicated region
        $region49: #{tpu_custom_call.1} parent=43 // pred_check
          %p1339 = pneg %p200
        $region50: #{tpu_custom_call.1} parent=43 // pred_check_branch
          %1341 = sbr.rel (%p1339) target = $region52
        $region51: #{tpu_custom_call.1} parent=43 // pred_region
          %s1342 = smul.u32 8, %s25
          %1344 = vsyncadd %s1318, 0
          %s1345 = smul.addr %s1342, 2
          %s1346 = smul.addr %s1345, 4
          %s1347 = scalar_lea.hbm %s7, %s1346
          %s1348 = sshll.u32 %s1321, 4
          %s1349 = int_to_ptr.vmem [resolvable:$true] %s1348
          %s1350 = sshll.u32 %s1347, 4
          %s1351 = int_to_ptr.hbm [resolvable:$true] %s1350
          %1356 = dma.vmem_to_hbm [thread:$0]  %s1349, 1024, %s1351, %s1318, 128, 128, 8
        $region52: #{tpu_custom_call.1} parent=43 // pred_fallthru
          _
      $region44: #{tpu_custom_call.1} parent=5 // pred_fallthru
        _
      %p1357 = scmp.le.s32.totalorder 2, %s20
      // Predicated region
      $region53: #{tpu_custom_call.1} parent=5 // pred_check
        %p1358 = pneg %p1357
      $region54: #{tpu_custom_call.1} parent=5 // pred_check_branch
        %1360 = sbr.rel (%p1358) target = $region56
      $region55: #{tpu_custom_call.1} parent=5 // pred_region
        %s1361 = ssub.s32 %s20, 2
        // Predicated region
        $region57: #{tpu_custom_call.1} parent=55 // pred_check
          %p1362 = pneg %p180
        $region58: #{tpu_custom_call.1} parent=55 // pred_check_branch
          %1364 = sbr.rel (%p1362) target = $region60
        $region59: #{tpu_custom_call.1} parent=55 // pred_region
          %s1365 = sand.u32 %s165, 1
          %s1366 = scalar_lea.sflag [#allocation3], %s1365
          %s1367 = sand.u32 %s165, 1
          %s1368 = smul.addr %s1367, 64
          %s1369 = scalar_lea.vmem [#allocation2], %s1368
          %1371 = dma.done %s1366, 1024
        $region60: #{tpu_custom_call.1} parent=55 // pred_fallthru
          _
        // Predicated region
        $region61: #{tpu_custom_call.1} parent=55 // pred_check
          %p1372 = pneg %p206
        $region62: #{tpu_custom_call.1} parent=55 // pred_check_branch
          %1374 = sbr.rel (%p1372) target = $region64
        $region63: #{tpu_custom_call.1} parent=55 // pred_region
          %s1375 = sand.u32 %s191, 1
          %s1376 = scalar_lea.sflag [#allocation5], %s1375
          %s1377 = sand.u32 %s191, 1
          %s1378 = smul.addr %s1377, 64
          %s1379 = scalar_lea.vmem [#allocation4], %s1378
          %1381 = dma.done %s1376, 1024
        $region64: #{tpu_custom_call.1} parent=55 // pred_fallthru
          _
      $region56: #{tpu_custom_call.1} parent=5 // pred_fallthru
        _
    $region6: #{tpu_custom_call.1} parent=1 // loop_footer
      %s24 = sadd.s32 1, %s20
    $region7: #{tpu_custom_call.1} parent=1 // loop_footer_branch
      %19 = sbr.rel target = $region3
    $region8: #{tpu_custom_call.1} parent=1 // loop_exit
      _
    %1382 = vsyncpa [#allocation3], 1
    %s1383 = scalar_lea.sflag [#allocation3], 1
    %1384 = vsyncpa %s1383, 1
    %1385 = vsyncpa [#allocation5], 1
    %s1386 = scalar_lea.sflag [#allocation5], 1
    %1387 = vsyncpa %s1386, 1

</llo_original>
